<compile_context>
chip_gen: v7x
topology: tpu7x:2x2x1
jax: 0.10.0
libtpu: 0.0.40
codegen_flags: <defaults>
</compile_context>

<pallas_src>
from functools import partial

import jax
import jax.numpy as jnp
from jax.experimental import pallas as pl
from jax.experimental.pallas import tpu as pltpu


def _qkv_kernel(x_ref, w_ref, b_ref, blk_ref, o_ref, *,
                num_heads, embed_dim, head_dim):
    E, H, D = embed_dim, num_heads, head_dim

    x = x_ref[...]                                       # (TN, E) f32
    # Fused q/k/v projection: single MXU matmul against pre-transposed (E, 3E).
    y = jnp.dot(x, w_ref[...], preferred_element_type=jnp.float32) + b_ref[...]

    q = y[:, 0 * E:1 * E]
    k = y[:, 1 * E:2 * E]
    v = y[:, 2 * E:3 * E]

    blk = blk_ref[...]                                   # (E, E) block-diag ones

    # Per-token head mixing (no softmax / no scale):
    #   out[n, h*D+d] = sum_g (sum_d' q[n,h*D+d'] * k[n,g*D+d']) * v[n,g*D+d]
    # Enumerate pairs via head shifts s (g = (h+s) mod H):
    #   out = sum_s ((q * roll_left(k, s*D)) @ blk) * roll_left(v, s*D)
    # '@ blk' performs the segmented sum over each head's D lanes (and its
    # broadcast back over those lanes) on the MXU -- no per-(h,g) cross-lane
    # reductions, all vector ops are full (TN, E) width.
    acc = jnp.dot(q * k, blk, preferred_element_type=jnp.float32) * v   # s = 0
    for s in range(1, H):
        sh = s * D
        ks = jnp.concatenate([k[:, sh:], k[:, :sh]], axis=-1)   # roll left s*D
        vs = jnp.concatenate([v[:, sh:], v[:, :sh]], axis=-1)
        acc = acc + jnp.dot(q * ks, blk,
                            preferred_element_type=jnp.float32) * vs

    o_ref[...] = acc.astype(o_ref.dtype)                 # single full-width store


def _pick_token_tile(total_tokens):
    # Large, 8-multiple token tiles that divide the flattened token count;
    # small/irregular sizes fall back to one full-extent block.
    for tn in (1024, 512, 256, 128):
        if total_tokens % tn == 0:
            return tn
    return total_tokens


def gatt_block_qkv(x, wq, wk, wv, bq, bk, bv, *, num_heads):
    """GattBlock(block_type='qkv') forward.  x: (B, HW, C) float32."""
    B, N, E = x.shape
    assert E % num_heads == 0
    head_dim = E // num_heads

    T = B * N
    TN = _pick_token_tile(T)

    # HBM-side prep: pre-transpose + fuse the three nn.Linear weights/biases
    # so the kernel does one (TN, E) @ (E, 3E) matmul with no in-kernel .T.
    w_fused = jnp.concatenate([wq.T, wk.T, wv.T], axis=1)          # (E, 3E)
    b_fused = jnp.concatenate([bq, bk, bv], axis=0)[None, :]       # (1, 3E)

    # Constant block-diagonal ones matrix: (p @ blk) sums each head's D lanes
    # and broadcasts the sum back over those lanes (segmented reduce on MXU).
    head_id = jnp.arange(E) // head_dim
    blk = (head_id[:, None] == head_id[None, :]).astype(jnp.float32)  # (E, E)

    kernel = partial(_qkv_kernel, num_heads=num_heads, embed_dim=E,
                     head_dim=head_dim)

    out_flat = pl.pallas_call(
        kernel,
        out_shape=jax.ShapeDtypeStruct((T, E), x.dtype),
        grid_spec=pltpu.PrefetchScalarGridSpec(
            num_scalar_prefetch=0,
            grid=(T // TN,),
            in_specs=[
                pl.BlockSpec((TN, E), lambda i: (i, 0)),      # x token tile
                pl.BlockSpec((E, 3 * E), lambda i: (0, 0)),   # fused W (resident)
                pl.BlockSpec((1, 3 * E), lambda i: (0, 0)),   # fused bias
                pl.BlockSpec((E, E), lambda i: (0, 0)),       # block-diag matrix
            ],
            out_specs=pl.BlockSpec((TN, E), lambda i: (i, 0)),
        ),
        compiler_params=pltpu.CompilerParams(
            dimension_semantics=("parallel",)),
    )(x.reshape(T, E), w_fused, b_fused, blk)

    return out_flat.reshape(B, N, E)


def qkv_reference(x, wq, wk, wv, bq, bk, bv, *, num_heads):
    """Pure-JAX reference mirroring the PyTorch QKVAttention forward."""
    B, N, E = x.shape
    D = E // num_heads
    q = (x @ wq.T + bq).reshape(B, N, num_heads, D)
    k = (x @ wk.T + bk).reshape(B, N, num_heads, D)
    v = (x @ wv.T + bv).reshape(B, N, num_heads, D)
    att = jnp.einsum('bnhd,bngd->bnhg', q, k)     # q @ k.permute(0,1,3,2)
    out = jnp.einsum('bnhg,bngd->bnhd', att, v)   # att @ v
    return out.reshape(B, N, E)


if __name__ == "__main__":
    # Small shapes consistent with GattBlock.forward: x is (b, hw, c).
    B, Hs, Ws, C = 2, 4, 4, 32
    HW = Hs * Ws
    NUM_HEADS = 4

    key = jax.random.PRNGKey(0)
    kx, kq, kk, kv, kbq, kbk, kbv = jax.random.split(key, 7)

    x = jax.random.normal(kx, (B, HW, C), dtype=jnp.float32)

    # Deterministic nn.Linear-style init: U(-1/sqrt(E), 1/sqrt(E)); W is (out, in).
    bound = 1.0 / (C ** 0.5)
    wq = jax.random.uniform(kq, (C, C), jnp.float32, -bound, bound)
    wk = jax.random.uniform(kk, (C, C), jnp.float32, -bound, bound)
    wv = jax.random.uniform(kv, (C, C), jnp.float32, -bound, bound)
    bq = jax.random.uniform(kbq, (C,), jnp.float32, -bound, bound)
    bk = jax.random.uniform(kbk, (C,), jnp.float32, -bound, bound)
    bv = jax.random.uniform(kbv, (C,), jnp.float32, -bound, bound)

    out = gatt_block_qkv(x, wq, wk, wv, bq, bk, bv, num_heads=NUM_HEADS)
    out = jax.block_until_ready(out)

    ref = qkv_reference(x, wq, wk, wv, bq, bk, bv, num_heads=NUM_HEADS)
    assert out.shape == (B, HW, C)
    assert jnp.allclose(out, ref, rtol=1e-4, atol=1e-4), "mismatch vs reference"

    print("KERNEL_OK")
</pallas_src>

<mosaic_0001>
module attributes {stable_mosaic.version = 11 : i64} {
  func.func @_qkv_kernel(%arg0: i32, %arg1: memref<32x32xf32, #tpu.memory_space<vmem>>, %arg2: memref<32x96xf32, #tpu.memory_space<vmem>>, %arg3: memref<1x96xf32, #tpu.memory_space<vmem>>, %arg4: memref<32x32xf32, #tpu.memory_space<vmem>>, %arg5: memref<32x32xf32, #tpu.memory_space<vmem>>) attributes {dimension_semantics = [#tpu.dimension_semantics<parallel>], iteration_bounds = array<i64: 1>, scalar_prefetch = 0 : i64, scratch_operands = 0 : i64, tpu.core_type = #tpu.core_type<tc>, window_params = [{transform_indices = @transform_0, window_bounds = array<i64: 32, 32>}, {pipeline_mode = #tpu.pipeline_mode<synchronous>, transform_indices = @transform_1, window_bounds = array<i64: 32, 96>}, {pipeline_mode = #tpu.pipeline_mode<synchronous>, transform_indices = @transform_2, window_bounds = array<i64: 1, 96>}, {pipeline_mode = #tpu.pipeline_mode<synchronous>, transform_indices = @transform_3, window_bounds = array<i64: 32, 32>}, {transform_indices = @transform_4, window_bounds = array<i64: 32, 32>}]} {
    %c0 = arith.constant 0 : index
    %c0_0 = arith.constant 0 : index
    %0 = vector.load %arg1[%c0, %c0_0] : memref<32x32xf32, #tpu.memory_space<vmem>>, vector<32x32xf32>
    %c0_1 = arith.constant 0 : index
    %c0_2 = arith.constant 0 : index
    %1 = vector.load %arg2[%c0_1, %c0_2] : memref<32x96xf32, #tpu.memory_space<vmem>>, vector<32x96xf32>
    %cst = arith.constant dense<0.000000e+00> : vector<32x96xf32>
    %2 = tpu.matmul %0, %1, %cst {dimension_numbers = #tpu.dot_dimension_numbers<[1], [0], [0], [1], [0, 0, 1, 1], [], []>} : vector<32x32xf32>, vector<32x96xf32>, vector<32x96xf32> -> vector<32x96xf32>
    %c0_3 = arith.constant 0 : index
    %c0_4 = arith.constant 0 : index
    %3 = vector.load %arg3[%c0_3, %c0_4] : memref<1x96xf32, #tpu.memory_space<vmem>>, vector<1x96xf32>
    %4 = vector.broadcast %3 : vector<1x96xf32> to vector<32x96xf32>
    %5 = arith.addf %2, %4 : vector<32x96xf32>
    %6 = vector.extract_strided_slice %5 {offsets = [0, 0], sizes = [32, 32], strides = [1, 1]} : vector<32x96xf32> to vector<32x32xf32>
    %7 = vector.extract_strided_slice %5 {offsets = [0, 32], sizes = [32, 32], strides = [1, 1]} : vector<32x96xf32> to vector<32x32xf32>
    %8 = vector.extract_strided_slice %5 {offsets = [0, 64], sizes = [32, 32], strides = [1, 1]} : vector<32x96xf32> to vector<32x32xf32>
    %c0_5 = arith.constant 0 : index
    %c0_6 = arith.constant 0 : index
    %9 = vector.load %arg4[%c0_5, %c0_6] : memref<32x32xf32, #tpu.memory_space<vmem>>, vector<32x32xf32>
    %10 = arith.mulf %6, %7 : vector<32x32xf32>
    %cst_7 = arith.constant dense<0.000000e+00> : vector<32x32xf32>
    %11 = tpu.matmul %10, %9, %cst_7 {dimension_numbers = #tpu.dot_dimension_numbers<[1], [0], [0], [1], [0, 0, 1, 1], [], []>} : vector<32x32xf32>, vector<32x32xf32>, vector<32x32xf32> -> vector<32x32xf32>
    %12 = arith.mulf %11, %8 : vector<32x32xf32>
    %13 = vector.extract_strided_slice %7 {offsets = [0, 8], sizes = [32, 24], strides = [1, 1]} : vector<32x32xf32> to vector<32x24xf32>
    %14 = vector.extract_strided_slice %7 {offsets = [0, 0], sizes = [32, 8], strides = [1, 1]} : vector<32x32xf32> to vector<32x8xf32>
    %15 = tpu.concatenate %13, %14 in 1 : vector<32x24xf32>, vector<32x8xf32> -> vector<32x32xf32>
    %16 = vector.extract_strided_slice %8 {offsets = [0, 8], sizes = [32, 24], strides = [1, 1]} : vector<32x32xf32> to vector<32x24xf32>
    %17 = vector.extract_strided_slice %8 {offsets = [0, 0], sizes = [32, 8], strides = [1, 1]} : vector<32x32xf32> to vector<32x8xf32>
    %18 = tpu.concatenate %16, %17 in 1 : vector<32x24xf32>, vector<32x8xf32> -> vector<32x32xf32>
    %19 = arith.mulf %6, %15 : vector<32x32xf32>
    %cst_8 = arith.constant dense<0.000000e+00> : vector<32x32xf32>
    %20 = tpu.matmul %19, %9, %cst_8 {dimension_numbers = #tpu.dot_dimension_numbers<[1], [0], [0], [1], [0, 0, 1, 1], [], []>} : vector<32x32xf32>, vector<32x32xf32>, vector<32x32xf32> -> vector<32x32xf32>
    %21 = arith.mulf %20, %18 : vector<32x32xf32>
    %22 = arith.addf %12, %21 : vector<32x32xf32>
    %23 = vector.extract_strided_slice %7 {offsets = [0, 16], sizes = [32, 16], strides = [1, 1]} : vector<32x32xf32> to vector<32x16xf32>
    %24 = vector.extract_strided_slice %7 {offsets = [0, 0], sizes = [32, 16], strides = [1, 1]} : vector<32x32xf32> to vector<32x16xf32>
    %25 = tpu.concatenate %23, %24 in 1 : vector<32x16xf32>, vector<32x16xf32> -> vector<32x32xf32>
    %26 = vector.extract_strided_slice %8 {offsets = [0, 16], sizes = [32, 16], strides = [1, 1]} : vector<32x32xf32> to vector<32x16xf32>
    %27 = vector.extract_strided_slice %8 {offsets = [0, 0], sizes = [32, 16], strides = [1, 1]} : vector<32x32xf32> to vector<32x16xf32>
    %28 = tpu.concatenate %26, %27 in 1 : vector<32x16xf32>, vector<32x16xf32> -> vector<32x32xf32>
    %29 = arith.mulf %6, %25 : vector<32x32xf32>
    %cst_9 = arith.constant dense<0.000000e+00> : vector<32x32xf32>
    %30 = tpu.matmul %29, %9, %cst_9 {dimension_numbers = #tpu.dot_dimension_numbers<[1], [0], [0], [1], [0, 0, 1, 1], [], []>} : vector<32x32xf32>, vector<32x32xf32>, vector<32x32xf32> -> vector<32x32xf32>
    %31 = arith.mulf %30, %28 : vector<32x32xf32>
    %32 = arith.addf %22, %31 : vector<32x32xf32>
    %33 = vector.extract_strided_slice %7 {offsets = [0, 24], sizes = [32, 8], strides = [1, 1]} : vector<32x32xf32> to vector<32x8xf32>
    %34 = vector.extract_strided_slice %7 {offsets = [0, 0], sizes = [32, 24], strides = [1, 1]} : vector<32x32xf32> to vector<32x24xf32>
    %35 = tpu.concatenate %33, %34 in 1 : vector<32x8xf32>, vector<32x24xf32> -> vector<32x32xf32>
    %36 = vector.extract_strided_slice %8 {offsets = [0, 24], sizes = [32, 8], strides = [1, 1]} : vector<32x32xf32> to vector<32x8xf32>
    %37 = vector.extract_strided_slice %8 {offsets = [0, 0], sizes = [32, 24], strides = [1, 1]} : vector<32x32xf32> to vector<32x24xf32>
    %38 = tpu.concatenate %36, %37 in 1 : vector<32x8xf32>, vector<32x24xf32> -> vector<32x32xf32>
    %39 = arith.mulf %6, %35 : vector<32x32xf32>
    %cst_10 = arith.constant dense<0.000000e+00> : vector<32x32xf32>
    %40 = tpu.matmul %39, %9, %cst_10 {dimension_numbers = #tpu.dot_dimension_numbers<[1], [0], [0], [1], [0, 0, 1, 1], [], []>} : vector<32x32xf32>, vector<32x32xf32>, vector<32x32xf32> -> vector<32x32xf32>
    %41 = arith.mulf %40, %38 : vector<32x32xf32>
    %42 = arith.addf %32, %41 : vector<32x32xf32>
    %c0_11 = arith.constant 0 : index
    %c0_12 = arith.constant 0 : index
    %43 = vector.load %arg5[%c0_11, %c0_12] : memref<32x32xf32, #tpu.memory_space<vmem>>, vector<32x32xf32>
    tpu.vector_store %arg5[%c0_11, %c0_12], %42 {strides = array<i32>} : memref<32x32xf32, #tpu.memory_space<vmem>>, vector<32x32xf32>,
    return
  }
  func.func @transform_0(%arg0: i32) -> (i32, i32) {
    %c0_i32 = arith.constant 0 : i32
    %c0_i32_0 = arith.constant 0 : i32
    return %arg0, %c0_i32 : i32, i32
  }
  func.func @transform_1(%arg0: i32) -> (i32, i32) {
    %c0_i32 = arith.constant 0 : i32
    %c0_i32_0 = arith.constant 0 : i32
    %c0_i32_1 = arith.constant 0 : i32
    return %c0_i32, %c0_i32_0 : i32, i32
  }
  func.func @transform_2(%arg0: i32) -> (i32, i32) {
    %c0_i32 = arith.constant 0 : i32
    %c0_i32_0 = arith.constant 0 : i32
    %c0_i32_1 = arith.constant 0 : i32
    return %c0_i32, %c0_i32_0 : i32, i32
  }
  func.func @transform_3(%arg0: i32) -> (i32, i32) {
    %c0_i32 = arith.constant 0 : i32
    %c0_i32_0 = arith.constant 0 : i32
    %c0_i32_1 = arith.constant 0 : i32
    return %c0_i32, %c0_i32_0 : i32, i32
  }
  func.func @transform_4(%arg0: i32) -> (i32, i32) {
    %c0_i32 = arith.constant 0 : i32
    %c0_i32_0 = arith.constant 0 : i32
    return %arg0, %c0_i32 : i32, i32
  }
}

</mosaic_0001>

<llo_original>
// kernel: tpu_custom_call.1
$region0: #{tpu_custom_call.1}
  #allocation0 [shape = 'u32[]', space=smem, size = 0x4, offset = 0x4, fixed_abs, tag = 'smem constant byte address 0x4 - core index']
  #allocation1 [shape = 'u32[144,128]{1,0:T(1,128)}', space=vmem, size = 0x12000, scoped, tag = 'internal scratch']
  %s0 = inlined_call_operand.hbm [shape: f32[32,32], index: 0, kind: input, shape index: {}]
  %s1 = inlined_call_operand.hbm [shape: f32[32,96], index: 1, kind: input, shape index: {}]
  %s2 = inlined_call_operand.vmem [shape: f32[1,96], index: 2, kind: input, shape index: {}]
  %s3 = inlined_call_operand.hbm [shape: f32[32,32], index: 3, kind: input, shape index: {}]
  %s4 = inlined_call_operand.hbm [shape: f32[32,32], index: 4, kind: output, shape index: {}]
  %s5 = sld [smem:[#allocation0]]
  $region38: #{tpu_custom_call.1} parent=0
    _
  %s7 = ssub.s32 1, %s5
  %s8 = scalar_select 0, %s7, %s5
  $region1: #{tpu_custom_call.1} parent=0
    #allocation2 [shape = 'u8[16384]{0}', space=vmem, size = 0x4000, scoped, tag = 'input window, operand 0, single buffered']
    #allocation3 [shape = 's32[1]{0}', space=sflag, size = 0x4, scoped, tag = 'scoped memory for tpu_custom_call.1']
    #allocation4 [shape = 's32[1]{0}', space=sflag, size = 0x4, scoped, tag = 'scoped memory for tpu_custom_call.1']
    #allocation5 [shape = 'u8[16384]{0}', space=vmem, size = 0x4000, scoped, tag = 'input window, operand 1, single buffered']
    #allocation6 [shape = 's32[1]{0}', space=sflag, size = 0x4, scoped, tag = 'scoped memory for tpu_custom_call.1']
    #allocation7 [shape = 'u8[16384]{0}', space=vmem, size = 0x4000, scoped, tag = 'input window, operand 3, single buffered']
    #allocation8 [shape = 'u8[16384]{0}', space=vmem, size = 0x4000, scoped, tag = 'output window, operand 0, single buffered']
    %9 = vsyncpa [#allocation3], 0
    %10 = vsyncpa [#allocation6], 0
    %11 = vsyncpa [#allocation4], 0
    // Predicated region
    $region2: #{tpu_custom_call.1} parent=1 // pred_check
      _
    $region3: #{tpu_custom_call.1} parent=1 // pred_check_branch
      %13 = sbr.rel (0) target = $region5
    $region4: #{tpu_custom_call.1} parent=1 // pred_region
      %s15 = ssub.s32 512, 512
      %16 = vsyncadd [#allocation3], %s15
      %s17 = sshll.u32 [#allocation2], 4
      %s18 = int_to_ptr.vmem [resolvable:$true] %s17
      %23 = dma.hbm_to_vmem [thread:$0]  %s0, 512, %s18, [#allocation3], 128, 128, 8
    $region5: #{tpu_custom_call.1} parent=1 // pred_fallthru
      _
    // Predicated region
    $region6: #{tpu_custom_call.1} parent=1 // pred_check
      _
    $region7: #{tpu_custom_call.1} parent=1 // pred_check_branch
      %25 = sbr.rel (0) target = $region9
    $region8: #{tpu_custom_call.1} parent=1 // pred_region
      %s27 = ssub.s32 512, 512
      %28 = vsyncadd [#allocation6], %s27
      %s29 = sshll.u32 [#allocation5], 4
      %s30 = int_to_ptr.vmem [resolvable:$true] %s29
      %35 = dma.hbm_to_vmem [thread:$0]  %s1, 512, %s30, [#allocation6], 128, 128, 8
    $region9: #{tpu_custom_call.1} parent=1 // pred_fallthru
      _
    // Predicated region
    $region10: #{tpu_custom_call.1} parent=1 // pred_check
      _
    $region11: #{tpu_custom_call.1} parent=1 // pred_check_branch
      %37 = sbr.rel (0) target = $region13
    $region12: #{tpu_custom_call.1} parent=1 // pred_region
      _
    $region13: #{tpu_custom_call.1} parent=1 // pred_fallthru
      _
    // Predicated region
    $region14: #{tpu_custom_call.1} parent=1 // pred_check
      _
    $region15: #{tpu_custom_call.1} parent=1 // pred_check_branch
      %39 = sbr.rel (0) target = $region17
    $region16: #{tpu_custom_call.1} parent=1 // pred_region
      %s41 = ssub.s32 512, 512
      %42 = vsyncadd [#allocation6], %s41
      %s43 = sshll.u32 [#allocation7], 4
      %s44 = int_to_ptr.vmem [resolvable:$true] %s43
      %49 = dma.hbm_to_vmem [thread:$0]  %s3, 512, %s44, [#allocation6], 128, 128, 8
    $region17: #{tpu_custom_call.1} parent=1 // pred_fallthru
      _
    // Predicated region
    $region18: #{tpu_custom_call.1} parent=1 // pred_check
      _
    $region19: #{tpu_custom_call.1} parent=1 // pred_check_branch
      %51 = sbr.rel (0) target = $region21
    $region20: #{tpu_custom_call.1} parent=1 // pred_region
      %52 = dma.done [#allocation3], 512
    $region21: #{tpu_custom_call.1} parent=1 // pred_fallthru
      _
    // Predicated region
    $region22: #{tpu_custom_call.1} parent=1 // pred_check
      _
    $region23: #{tpu_custom_call.1} parent=1 // pred_check_branch
      %54 = sbr.rel (0) target = $region25
    $region24: #{tpu_custom_call.1} parent=1 // pred_region
      %55 = dma.done [#allocation6], 512
    $region25: #{tpu_custom_call.1} parent=1 // pred_fallthru
      _
    // Predicated region
    $region26: #{tpu_custom_call.1} parent=1 // pred_check
      _
    $region27: #{tpu_custom_call.1} parent=1 // pred_check_branch
      %57 = sbr.rel (0) target = $region29
    $region28: #{tpu_custom_call.1} parent=1 // pred_region
      %58 = dma.done [#allocation6], 512
    $region29: #{tpu_custom_call.1} parent=1 // pred_fallthru
      _
    %v59 = vld [vmem:[#allocation2] sm:$0xff]
    %v60 = vld [vmem:[#allocation2 + $0x8] sm:$0xff]
    %v61 = vld [vmem:[#allocation2 + $0x10] sm:$0xff]
    %v62 = vld [vmem:[#allocation2 + $0x18] sm:$0xff]
    %v63 = vld [vmem:[#allocation5] sm:$0xff]
    %v64 = vld [vmem:[#allocation5 + $0x8] sm:$0xff]
    %v65 = vld [vmem:[#allocation5 + $0x10] sm:$0xff]
    %v66 = vld [vmem:[#allocation5 + $0x18] sm:$0xff]
    %v67 = vld [vmem:[%s2] sm:$0x1]
    %v69 = vlaneseq
    %v70 = vshrl.u32 %v69, 7
    %v71 = vsub.s32 0, %v70
    %v72 = vrot.slane %v67, %v71
    %vm74 = vcmask 261120
    %v76 = vsel %vm74, %v59, 0
    %v79 = vsel %vm74, %v60, 0
    %v82 = vsel %vm74, %v61, 0
    %v85 = vsel %vm74, %v62, 0
    %87 = vmatprep.subr.mxu0 0.0
    %88 = vmatpush1.msra.mxu0 %v63
    %89 = vmatprep.subr.mxu0 0.0
    %90 = vmatpush1.msra.mxu0 %v64
    %91 = vmatprep.subr.mxu0 0.0
    %92 = vmatpush1.msra.mxu0 %v65
    %93 = vmatprep.subr.mxu0 0.0
    %94 = vmatpush1.msra.mxu0 %v66
    %95 = vmatprep.subr.mxu0 0.0
    %96 = vmatpush1.msra.mxu0 0.0
    %97 = vmatprep.subr.mxu0 0.0
    %98 = vmatpush1.msra.mxu0 0.0
    %99 = vmatprep.subr.mxu0 0.0
    %100 = vmatpush1.msra.mxu0 0.0
    %101 = vmatprep.subr.mxu0 0.0
    %102 = vmatpush1.msra.mxu0 0.0
    %103 = vmatprep.subr.mxu0 0.0
    %104 = vmatpush1.msra.mxu0 0.0
    %105 = vmatprep.subr.mxu0 0.0
    %106 = vmatpush1.msra.mxu0 0.0
    %107 = vmatprep.subr.mxu0 0.0
    %108 = vmatpush1.msra.mxu0 0.0
    %109 = vmatprep.subr.mxu0 0.0
    %110 = vmatpush1.msra.mxu0 0.0
    %111 = vmatprep.subr.mxu0 0.0
    %112 = vmatpush1.msra.mxu0 0.0
    %113 = vmatprep.subr.mxu0 0.0
    %114 = vmatpush1.msra.mxu0 0.0
    %115 = vmatprep.subr.mxu0 0.0
    %116 = vmatpush1.msra.mxu0 0.0
    %117 = vmatprep.subr.mxu0 0.0
    %118 = vmatpush1.msra.mxu0 0.0
    %119 = vmatprep.subr.mxu0 0.0
    %120 = vmatpush1.msra.mxu0 0.0
    %121 = vmatprep.subr.mxu0 0.0
    %122 = vmatpush1.msra.mxu0 0.0
    %123 = vmatprep.subr.mxu0 0.0
    %124 = vmatpush1.msra.mxu0 0.0
    %125 = vmatprep.subr.mxu0 0.0
    %126 = vmatpush1.msra.mxu0 0.0
    %127 = vmatprep.subr.mxu0 0.0
    %128 = vmatpush1.msra.mxu0 0.0
    %129 = vmatprep.subr.mxu0 0.0
    %130 = vmatpush1.msra.mxu0 0.0
    %131 = vmatprep.subr.mxu0 0.0
    %132 = vmatpush1.msra.mxu0 0.0
    %133 = vmatprep.subr.mxu0 0.0
    %134 = vmatpush1.msra.mxu0 0.0
    %135 = vmatprep.subr.mxu0 0.0
    %136 = vmatpush1.msra.mxu0 0.0
    %137 = vmatprep.subr.mxu0 0.0
    %138 = vmatpush1.msra.mxu0 0.0
    %139 = vmatprep.subr.mxu0 0.0
    %140 = vmatpush1.msra.mxu0 0.0
    %141 = vmatprep.subr.mxu0 0.0
    %142 = vmatpush1.msra.mxu0 0.0
    %143 = vmatprep.subr.mxu0 0.0
    %144 = vmatpush1.msra.mxu0 0.0
    %145 = vmatprep.subr.mxu0 0.0
    %146 = vmatpush1.msra.mxu0 0.0
    %147 = vmatprep.subr.mxu0 0.0
    %148 = vmatpush1.msra.mxu0 0.0
    %149 = vmatprep.subr.mxu0 0.0
    %150 = vmatpush1.msra.mxu0 0.0
    %151 = vmatprep.mubr.f32.mxu0 0.0
    %152 = vmatmul.mubr.f32.gmra.mrb[0].mxu0 %v76
    %v153 = vpop.f32.mrb[0].mxu0
    %v154 = vadd.f32 %v72, %v153
    %v155 = vpop.f32.mrb[0].mxu0
    %156 = vmatprep.mubr.f32.mxu0 0.0
    %157 = vmatmul.mubr.f32.gmra.mrb[0].mxu0 %v79
    %v158 = vpop.f32.mrb[0].mxu0
    %v159 = vadd.f32 %v72, %v158
    %v160 = vpop.f32.mrb[0].mxu0
    %161 = vmatprep.mubr.f32.mxu0 0.0
    %162 = vmatmul.mubr.f32.gmra.mrb[0].mxu0 %v82
    %v163 = vpop.f32.mrb[0].mxu0
    %v164 = vadd.f32 %v72, %v163
    %v165 = vpop.f32.mrb[0].mxu0
    %166 = vmatprep.mubr.f32.mxu0 0.0
    %167 = vmatmul.mubr.f32.gmra.mrb[0].mxu0 %v85
    %v168 = vpop.f32.mrb[0].mxu0
    %v169 = vadd.f32 %v72, %v168
    %v170 = vpop.f32.mrb[0].mxu0
    %171 = vdwg.mxu0
    %v172 = vld [vmem:[#allocation7] sm:$0xff]
    %v173 = vld [vmem:[#allocation7 + $0x8] sm:$0xff]
    %v174 = vld [vmem:[#allocation7 + $0x10] sm:$0xff]
    %v175 = vld [vmem:[#allocation7 + $0x18] sm:$0xff]
    %180 = vrot.lane.b32.xlu0 %v154, 96
    %v181 = vpop.permute.xlu0 %180
    %182 = vrot.lane.b32.xlu0 %v159, 96
    %v183 = vpop.permute.xlu0 %182
    %184 = vrot.lane.b32.xlu0 %v164, 96
    %v185 = vpop.permute.xlu0 %184
    %186 = vrot.lane.b32.xlu0 %v169, 96
    %v187 = vpop.permute.xlu0 %186
    %v192 = vmul.f32 %v154, %v181
    %v193 = vmul.f32 %v159, %v183
    %v194 = vmul.f32 %v164, %v185
    %v195 = vmul.f32 %v169, %v187
    %v197 = vsel %vm74, %v192, 0
    %v200 = vsel %vm74, %v193, 0
    %v203 = vsel %vm74, %v194, 0
    %v206 = vsel %vm74, %v195, 0
    %208 = vmatprep.subr.mxu0 0.0
    %209 = vmatpush1.msra.mxu0 %v172
    %210 = vmatprep.subr.mxu0 0.0
    %211 = vmatpush1.msra.mxu0 %v173
    %212 = vmatprep.subr.mxu0 0.0
    %213 = vmatpush1.msra.mxu0 %v174
    %214 = vmatprep.subr.mxu0 0.0
    %215 = vmatpush1.msra.mxu0 %v175
    %216 = vmatprep.subr.mxu0 0.0
    %217 = vmatpush1.msra.mxu0 0.0
    %218 = vmatprep.subr.mxu0 0.0
    %219 = vmatpush1.msra.mxu0 0.0
    %220 = vmatprep.subr.mxu0 0.0
    %221 = vmatpush1.msra.mxu0 0.0
    %222 = vmatprep.subr.mxu0 0.0
    %223 = vmatpush1.msra.mxu0 0.0
    %224 = vmatprep.subr.mxu0 0.0
    %225 = vmatpush1.msra.mxu0 0.0
    %226 = vmatprep.subr.mxu0 0.0
    %227 = vmatpush1.msra.mxu0 0.0
    %228 = vmatprep.subr.mxu0 0.0
    %229 = vmatpush1.msra.mxu0 0.0
    %230 = vmatprep.subr.mxu0 0.0
    %231 = vmatpush1.msra.mxu0 0.0
    %232 = vmatprep.subr.mxu0 0.0
    %233 = vmatpush1.msra.mxu0 0.0
    %234 = vmatprep.subr.mxu0 0.0
    %235 = vmatpush1.msra.mxu0 0.0
    %236 = vmatprep.subr.mxu0 0.0
    %237 = vmatpush1.msra.mxu0 0.0
    %238 = vmatprep.subr.mxu0 0.0
    %239 = vmatpush1.msra.mxu0 0.0
    %240 = vmatprep.subr.mxu0 0.0
    %241 = vmatpush1.msra.mxu0 0.0
    %242 = vmatprep.subr.mxu0 0.0
    %243 = vmatpush1.msra.mxu0 0.0
    %244 = vmatprep.subr.mxu0 0.0
    %245 = vmatpush1.msra.mxu0 0.0
    %246 = vmatprep.subr.mxu0 0.0
    %247 = vmatpush1.msra.mxu0 0.0
    %248 = vmatprep.subr.mxu0 0.0
    %249 = vmatpush1.msra.mxu0 0.0
    %250 = vmatprep.subr.mxu0 0.0
    %251 = vmatpush1.msra.mxu0 0.0
    %252 = vmatprep.subr.mxu0 0.0
    %253 = vmatpush1.msra.mxu0 0.0
    %254 = vmatprep.subr.mxu0 0.0
    %255 = vmatpush1.msra.mxu0 0.0
    %256 = vmatprep.subr.mxu0 0.0
    %257 = vmatpush1.msra.mxu0 0.0
    %258 = vmatprep.subr.mxu0 0.0
    %259 = vmatpush1.msra.mxu0 0.0
    %260 = vmatprep.subr.mxu0 0.0
    %261 = vmatpush1.msra.mxu0 0.0
    %262 = vmatprep.subr.mxu0 0.0
    %263 = vmatpush1.msra.mxu0 0.0
    %264 = vmatprep.subr.mxu0 0.0
    %265 = vmatpush1.msra.mxu0 0.0
    %266 = vmatprep.subr.mxu0 0.0
    %267 = vmatpush1.msra.mxu0 0.0
    %268 = vmatprep.subr.mxu0 0.0
    %269 = vmatpush1.msra.mxu0 0.0
    %270 = vmatprep.subr.mxu0 0.0
    %271 = vmatpush1.msra.mxu0 0.0
    %272 = vmatprep.mubr.f32.mxu0 0.0
    %273 = vmatmul.mubr.f32.gmra.mrb[0].mxu0 %v197
    %v274 = vpop.f32.mrb[0].mxu0
    %v275 = vadd.f32 0.0, %v274
    %v276 = vpop.f32.mrb[0].mxu0
    %277 = vmatprep.mubr.f32.mxu0 0.0
    %278 = vmatmul.mubr.f32.gmra.mrb[0].mxu0 %v200
    %v279 = vpop.f32.mrb[0].mxu0
    %v280 = vadd.f32 0.0, %v279
    %v281 = vpop.f32.mrb[0].mxu0
    %282 = vmatprep.mubr.f32.mxu0 0.0
    %283 = vmatmul.mubr.f32.gmra.mrb[0].mxu0 %v203
    %v284 = vpop.f32.mrb[0].mxu0
    %v285 = vadd.f32 0.0, %v284
    %v286 = vpop.f32.mrb[0].mxu0
    %287 = vmatprep.mubr.f32.mxu0 0.0
    %288 = vmatmul.mubr.f32.gmra.mrb[0].mxu0 %v206
    %v289 = vpop.f32.mrb[0].mxu0
    %v290 = vadd.f32 0.0, %v289
    %v291 = vpop.f32.mrb[0].mxu0
    %292 = vdwg.mxu0
    %293 = vrot.lane.b32.xlu0 %v154, 64
    %v294 = vpop.permute.xlu0 %293
    %295 = vrot.lane.b32.xlu0 %v159, 64
    %v296 = vpop.permute.xlu0 %295
    %297 = vrot.lane.b32.xlu0 %v164, 64
    %v298 = vpop.permute.xlu0 %297
    %299 = vrot.lane.b32.xlu0 %v169, 64
    %v300 = vpop.permute.xlu0 %299
    %v305 = vmul.f32 %v275, %v294
    %v306 = vmul.f32 %v280, %v296
    %v307 = vmul.f32 %v285, %v298
    %v308 = vmul.f32 %v290, %v300
    %309 = vrot.lane.b32.xlu0 %v154, 88
    %v310 = vpop.permute.xlu0 %309
    %311 = vrot.lane.b32.xlu0 %v159, 88
    %v312 = vpop.permute.xlu0 %311
    %313 = vrot.lane.b32.xlu0 %v164, 88
    %v314 = vpop.permute.xlu0 %313
    %315 = vrot.lane.b32.xlu0 %v169, 88
    %v316 = vpop.permute.xlu0 %315
    %321 = vrot.lane.b32.xlu0 %v154, 120
    %v322 = vpop.permute.xlu0 %321
    %323 = vrot.lane.b32.xlu0 %v159, 120
    %v324 = vpop.permute.xlu0 %323
    %325 = vrot.lane.b32.xlu0 %v164, 120
    %v326 = vpop.permute.xlu0 %325
    %327 = vrot.lane.b32.xlu0 %v169, 120
    %v328 = vpop.permute.xlu0 %327
    %vm333 = vcmask 195584
    %v334 = vsel %vm333, %v310, %v322
    %v335 = vsel %vm333, %v312, %v324
    %v336 = vsel %vm333, %v314, %v326
    %v337 = vsel %vm333, %v316, %v328
    %338 = vrot.lane.b32.xlu0 %v154, 56
    %v339 = vpop.permute.xlu0 %338
    %340 = vrot.lane.b32.xlu0 %v159, 56
    %v341 = vpop.permute.xlu0 %340
    %342 = vrot.lane.b32.xlu0 %v164, 56
    %v343 = vpop.permute.xlu0 %342
    %344 = vrot.lane.b32.xlu0 %v169, 56
    %v345 = vpop.permute.xlu0 %344
    %v350 = vsel %vm333, %v339, %v310
    %v351 = vsel %vm333, %v341, %v312
    %v352 = vsel %vm333, %v343, %v314
    %v353 = vsel %vm333, %v345, %v316
    %v354 = vmul.f32 %v154, %v334
    %v355 = vmul.f32 %v159, %v335
    %v356 = vmul.f32 %v164, %v336
    %v357 = vmul.f32 %v169, %v337
    %v359 = vsel %vm74, %v354, 0
    %v362 = vsel %vm74, %v355, 0
    %v365 = vsel %vm74, %v356, 0
    %v368 = vsel %vm74, %v357, 0
    %370 = vmatprep.subr.mxu0 0.0
    %371 = vmatpush1.msra.mxu0 %v172
    %372 = vmatprep.subr.mxu0 0.0
    %373 = vmatpush1.msra.mxu0 %v173
    %374 = vmatprep.subr.mxu0 0.0
    %375 = vmatpush1.msra.mxu0 %v174
    %376 = vmatprep.subr.mxu0 0.0
    %377 = vmatpush1.msra.mxu0 %v175
    %378 = vmatprep.subr.mxu0 0.0
    %379 = vmatpush1.msra.mxu0 0.0
    %380 = vmatprep.subr.mxu0 0.0
    %381 = vmatpush1.msra.mxu0 0.0
    %382 = vmatprep.subr.mxu0 0.0
    %383 = vmatpush1.msra.mxu0 0.0
    %384 = vmatprep.subr.mxu0 0.0
    %385 = vmatpush1.msra.mxu0 0.0
    %386 = vmatprep.subr.mxu0 0.0
    %387 = vmatpush1.msra.mxu0 0.0
    %388 = vmatprep.subr.mxu0 0.0
    %389 = vmatpush1.msra.mxu0 0.0
    %390 = vmatprep.subr.mxu0 0.0
    %391 = vmatpush1.msra.mxu0 0.0
    %392 = vmatprep.subr.mxu0 0.0
    %393 = vmatpush1.msra.mxu0 0.0
    %394 = vmatprep.subr.mxu0 0.0
    %395 = vmatpush1.msra.mxu0 0.0
    %396 = vmatprep.subr.mxu0 0.0
    %397 = vmatpush1.msra.mxu0 0.0
    %398 = vmatprep.subr.mxu0 0.0
    %399 = vmatpush1.msra.mxu0 0.0
    %400 = vmatprep.subr.mxu0 0.0
    %401 = vmatpush1.msra.mxu0 0.0
    %402 = vmatprep.subr.mxu0 0.0
    %403 = vmatpush1.msra.mxu0 0.0
    %404 = vmatprep.subr.mxu0 0.0
    %405 = vmatpush1.msra.mxu0 0.0
    %406 = vmatprep.subr.mxu0 0.0
    %407 = vmatpush1.msra.mxu0 0.0
    %408 = vmatprep.subr.mxu0 0.0
    %409 = vmatpush1.msra.mxu0 0.0
    %410 = vmatprep.subr.mxu0 0.0
    %411 = vmatpush1.msra.mxu0 0.0
    %412 = vmatprep.subr.mxu0 0.0
    %413 = vmatpush1.msra.mxu0 0.0
    %414 = vmatprep.subr.mxu0 0.0
    %415 = vmatpush1.msra.mxu0 0.0
    %416 = vmatprep.subr.mxu0 0.0
    %417 = vmatpush1.msra.mxu0 0.0
    %418 = vmatprep.subr.mxu0 0.0
    %419 = vmatpush1.msra.mxu0 0.0
    %420 = vmatprep.subr.mxu0 0.0
    %421 = vmatpush1.msra.mxu0 0.0
    %422 = vmatprep.subr.mxu0 0.0
    %423 = vmatpush1.msra.mxu0 0.0
    %424 = vmatprep.subr.mxu0 0.0
    %425 = vmatpush1.msra.mxu0 0.0
    %426 = vmatprep.subr.mxu0 0.0
    %427 = vmatpush1.msra.mxu0 0.0
    %428 = vmatprep.subr.mxu0 0.0
    %429 = vmatpush1.msra.mxu0 0.0
    %430 = vmatprep.subr.mxu0 0.0
    %431 = vmatpush1.msra.mxu0 0.0
    %432 = vmatprep.subr.mxu0 0.0
    %433 = vmatpush1.msra.mxu0 0.0
    %434 = vmatprep.mubr.f32.mxu0 0.0
    %435 = vmatmul.mubr.f32.gmra.mrb[0].mxu0 %v359
    %v436 = vpop.f32.mrb[0].mxu0
    %v437 = vadd.f32 0.0, %v436
    %v438 = vpop.f32.mrb[0].mxu0
    %439 = vmatprep.mubr.f32.mxu0 0.0
    %440 = vmatmul.mubr.f32.gmra.mrb[0].mxu0 %v362
    %v441 = vpop.f32.mrb[0].mxu0
    %v442 = vadd.f32 0.0, %v441
    %v443 = vpop.f32.mrb[0].mxu0
    %444 = vmatprep.mubr.f32.mxu0 0.0
    %445 = vmatmul.mubr.f32.gmra.mrb[0].mxu0 %v365
    %v446 = vpop.f32.mrb[0].mxu0
    %v447 = vadd.f32 0.0, %v446
    %v448 = vpop.f32.mrb[0].mxu0
    %449 = vmatprep.mubr.f32.mxu0 0.0
    %450 = vmatmul.mubr.f32.gmra.mrb[0].mxu0 %v368
    %v451 = vpop.f32.mrb[0].mxu0
    %v452 = vadd.f32 0.0, %v451
    %v453 = vpop.f32.mrb[0].mxu0
    %454 = vdwg.mxu0
    %v455 = vmul.f32 %v437, %v350
    %v456 = vmul.f32 %v442, %v351
    %v457 = vmul.f32 %v447, %v352
    %v458 = vmul.f32 %v452, %v353
    %v459 = vadd.f32 %v305, %v455
    %v460 = vadd.f32 %v306, %v456
    %v461 = vadd.f32 %v307, %v457
    %v462 = vadd.f32 %v308, %v458
    %463 = vrot.lane.b32.xlu0 %v154, 80
    %v464 = vpop.permute.xlu0 %463
    %465 = vrot.lane.b32.xlu0 %v159, 80
    %v466 = vpop.permute.xlu0 %465
    %467 = vrot.lane.b32.xlu0 %v164, 80
    %v468 = vpop.permute.xlu0 %467
    %469 = vrot.lane.b32.xlu0 %v169, 80
    %v470 = vpop.permute.xlu0 %469
    %475 = vrot.lane.b32.xlu0 %v154, 112
    %v476 = vpop.permute.xlu0 %475
    %477 = vrot.lane.b32.xlu0 %v159, 112
    %v478 = vpop.permute.xlu0 %477
    %479 = vrot.lane.b32.xlu0 %v164, 112
    %v480 = vpop.permute.xlu0 %479
    %481 = vrot.lane.b32.xlu0 %v169, 112
    %v482 = vpop.permute.xlu0 %481
    %vm487 = vcmask 130048
    %v488 = vsel %vm487, %v464, %v476
    %v489 = vsel %vm487, %v466, %v478
    %v490 = vsel %vm487, %v468, %v480
    %v491 = vsel %vm487, %v470, %v482
    %492 = vrot.lane.b32.xlu0 %v154, 48
    %v493 = vpop.permute.xlu0 %492
    %494 = vrot.lane.b32.xlu0 %v159, 48
    %v495 = vpop.permute.xlu0 %494
    %496 = vrot.lane.b32.xlu0 %v164, 48
    %v497 = vpop.permute.xlu0 %496
    %498 = vrot.lane.b32.xlu0 %v169, 48
    %v499 = vpop.permute.xlu0 %498
    %v504 = vsel %vm487, %v493, %v464
    %v505 = vsel %vm487, %v495, %v466
    %v506 = vsel %vm487, %v497, %v468
    %v507 = vsel %vm487, %v499, %v470
    %v508 = vmul.f32 %v154, %v488
    %v509 = vmul.f32 %v159, %v489
    %v510 = vmul.f32 %v164, %v490
    %v511 = vmul.f32 %v169, %v491
    %v513 = vsel %vm74, %v508, 0
    %v516 = vsel %vm74, %v509, 0
    %v519 = vsel %vm74, %v510, 0
    %v522 = vsel %vm74, %v511, 0
    %524 = vmatprep.subr.mxu0 0.0
    %525 = vmatpush1.msra.mxu0 %v172
    %526 = vmatprep.subr.mxu0 0.0
    %527 = vmatpush1.msra.mxu0 %v173
    %528 = vmatprep.subr.mxu0 0.0
    %529 = vmatpush1.msra.mxu0 %v174
    %530 = vmatprep.subr.mxu0 0.0
    %531 = vmatpush1.msra.mxu0 %v175
    %532 = vmatprep.subr.mxu0 0.0
    %533 = vmatpush1.msra.mxu0 0.0
    %534 = vmatprep.subr.mxu0 0.0
    %535 = vmatpush1.msra.mxu0 0.0
    %536 = vmatprep.subr.mxu0 0.0
    %537 = vmatpush1.msra.mxu0 0.0
    %538 = vmatprep.subr.mxu0 0.0
    %539 = vmatpush1.msra.mxu0 0.0
    %540 = vmatprep.subr.mxu0 0.0
    %541 = vmatpush1.msra.mxu0 0.0
    %542 = vmatprep.subr.mxu0 0.0
    %543 = vmatpush1.msra.mxu0 0.0
    %544 = vmatprep.subr.mxu0 0.0
    %545 = vmatpush1.msra.mxu0 0.0
    %546 = vmatprep.subr.mxu0 0.0
    %547 = vmatpush1.msra.mxu0 0.0
    %548 = vmatprep.subr.mxu0 0.0
    %549 = vmatpush1.msra.mxu0 0.0
    %550 = vmatprep.subr.mxu0 0.0
    %551 = vmatpush1.msra.mxu0 0.0
    %552 = vmatprep.subr.mxu0 0.0
    %553 = vmatpush1.msra.mxu0 0.0
    %554 = vmatprep.subr.mxu0 0.0
    %555 = vmatpush1.msra.mxu0 0.0
    %556 = vmatprep.subr.mxu0 0.0
    %557 = vmatpush1.msra.mxu0 0.0
    %558 = vmatprep.subr.mxu0 0.0
    %559 = vmatpush1.msra.mxu0 0.0
    %560 = vmatprep.subr.mxu0 0.0
    %561 = vmatpush1.msra.mxu0 0.0
    %562 = vmatprep.subr.mxu0 0.0
    %563 = vmatpush1.msra.mxu0 0.0
    %564 = vmatprep.subr.mxu0 0.0
    %565 = vmatpush1.msra.mxu0 0.0
    %566 = vmatprep.subr.mxu0 0.0
    %567 = vmatpush1.msra.mxu0 0.0
    %568 = vmatprep.subr.mxu0 0.0
    %569 = vmatpush1.msra.mxu0 0.0
    %570 = vmatprep.subr.mxu0 0.0
    %571 = vmatpush1.msra.mxu0 0.0
    %572 = vmatprep.subr.mxu0 0.0
    %573 = vmatpush1.msra.mxu0 0.0
    %574 = vmatprep.subr.mxu0 0.0
    %575 = vmatpush1.msra.mxu0 0.0
    %576 = vmatprep.subr.mxu0 0.0
    %577 = vmatpush1.msra.mxu0 0.0
    %578 = vmatprep.subr.mxu0 0.0
    %579 = vmatpush1.msra.mxu0 0.0
    %580 = vmatprep.subr.mxu0 0.0
    %581 = vmatpush1.msra.mxu0 0.0
    %582 = vmatprep.subr.mxu0 0.0
    %583 = vmatpush1.msra.mxu0 0.0
    %584 = vmatprep.subr.mxu0 0.0
    %585 = vmatpush1.msra.mxu0 0.0
    %586 = vmatprep.subr.mxu0 0.0
    %587 = vmatpush1.msra.mxu0 0.0
    %588 = vmatprep.mubr.f32.mxu0 0.0
    %589 = vmatmul.mubr.f32.gmra.mrb[0].mxu0 %v513
    %v590 = vpop.f32.mrb[0].mxu0
    %v591 = vadd.f32 0.0, %v590
    %v592 = vpop.f32.mrb[0].mxu0
    %593 = vmatprep.mubr.f32.mxu0 0.0
    %594 = vmatmul.mubr.f32.gmra.mrb[0].mxu0 %v516
    %v595 = vpop.f32.mrb[0].mxu0
    %v596 = vadd.f32 0.0, %v595
    %v597 = vpop.f32.mrb[0].mxu0
    %598 = vmatprep.mubr.f32.mxu0 0.0
    %599 = vmatmul.mubr.f32.gmra.mrb[0].mxu0 %v519
    %v600 = vpop.f32.mrb[0].mxu0
    %v601 = vadd.f32 0.0, %v600
    %v602 = vpop.f32.mrb[0].mxu0
    %603 = vmatprep.mubr.f32.mxu0 0.0
    %604 = vmatmul.mubr.f32.gmra.mrb[0].mxu0 %v522
    %v605 = vpop.f32.mrb[0].mxu0
    %v606 = vadd.f32 0.0, %v605
    %v607 = vpop.f32.mrb[0].mxu0
    %608 = vdwg.mxu0
    %v609 = vmul.f32 %v591, %v504
    %v610 = vmul.f32 %v596, %v505
    %v611 = vmul.f32 %v601, %v506
    %v612 = vmul.f32 %v606, %v507
    %v613 = vadd.f32 %v459, %v609
    %v614 = vadd.f32 %v460, %v610
    %v615 = vadd.f32 %v461, %v611
    %v616 = vadd.f32 %v462, %v612
    %617 = vrot.lane.b32.xlu0 %v154, 72
    %v618 = vpop.permute.xlu0 %617
    %619 = vrot.lane.b32.xlu0 %v159, 72
    %v620 = vpop.permute.xlu0 %619
    %621 = vrot.lane.b32.xlu0 %v164, 72
    %v622 = vpop.permute.xlu0 %621
    %623 = vrot.lane.b32.xlu0 %v169, 72
    %v624 = vpop.permute.xlu0 %623
    %629 = vrot.lane.b32.xlu0 %v154, 104
    %v630 = vpop.permute.xlu0 %629
    %631 = vrot.lane.b32.xlu0 %v159, 104
    %v632 = vpop.permute.xlu0 %631
    %633 = vrot.lane.b32.xlu0 %v164, 104
    %v634 = vpop.permute.xlu0 %633
    %635 = vrot.lane.b32.xlu0 %v169, 104
    %v636 = vpop.permute.xlu0 %635
    %vm641 = vcmask 64512
    %v642 = vsel %vm641, %v618, %v630
    %v643 = vsel %vm641, %v620, %v632
    %v644 = vsel %vm641, %v622, %v634
    %v645 = vsel %vm641, %v624, %v636
    %646 = vrot.lane.b32.xlu0 %v154, 40
    %v647 = vpop.permute.xlu0 %646
    %648 = vrot.lane.b32.xlu0 %v159, 40
    %v649 = vpop.permute.xlu0 %648
    %650 = vrot.lane.b32.xlu0 %v164, 40
    %v651 = vpop.permute.xlu0 %650
    %652 = vrot.lane.b32.xlu0 %v169, 40
    %v653 = vpop.permute.xlu0 %652
    %v658 = vsel %vm641, %v647, %v618
    %v659 = vsel %vm641, %v649, %v620
    %v660 = vsel %vm641, %v651, %v622
    %v661 = vsel %vm641, %v653, %v624
    %v662 = vmul.f32 %v154, %v642
    %v663 = vmul.f32 %v159, %v643
    %v664 = vmul.f32 %v164, %v644
    %v665 = vmul.f32 %v169, %v645
    %v667 = vsel %vm74, %v662, 0
    %v670 = vsel %vm74, %v663, 0
    %v673 = vsel %vm74, %v664, 0
    %v676 = vsel %vm74, %v665, 0
    %678 = vmatprep.subr.mxu0 0.0
    %679 = vmatpush1.msra.mxu0 %v172
    %680 = vmatprep.subr.mxu0 0.0
    %681 = vmatpush1.msra.mxu0 %v173
    %682 = vmatprep.subr.mxu0 0.0
    %683 = vmatpush1.msra.mxu0 %v174
    %684 = vmatprep.subr.mxu0 0.0
    %685 = vmatpush1.msra.mxu0 %v175
    %686 = vmatprep.subr.mxu0 0.0
    %687 = vmatpush1.msra.mxu0 0.0
    %688 = vmatprep.subr.mxu0 0.0
    %689 = vmatpush1.msra.mxu0 0.0
    %690 = vmatprep.subr.mxu0 0.0
    %691 = vmatpush1.msra.mxu0 0.0
    %692 = vmatprep.subr.mxu0 0.0
    %693 = vmatpush1.msra.mxu0 0.0
    %694 = vmatprep.subr.mxu0 0.0
    %695 = vmatpush1.msra.mxu0 0.0
    %696 = vmatprep.subr.mxu0 0.0
    %697 = vmatpush1.msra.mxu0 0.0
    %698 = vmatprep.subr.mxu0 0.0
    %699 = vmatpush1.msra.mxu0 0.0
    %700 = vmatprep.subr.mxu0 0.0
    %701 = vmatpush1.msra.mxu0 0.0
    %702 = vmatprep.subr.mxu0 0.0
    %703 = vmatpush1.msra.mxu0 0.0
    %704 = vmatprep.subr.mxu0 0.0
    %705 = vmatpush1.msra.mxu0 0.0
    %706 = vmatprep.subr.mxu0 0.0
    %707 = vmatpush1.msra.mxu0 0.0
    %708 = vmatprep.subr.mxu0 0.0
    %709 = vmatpush1.msra.mxu0 0.0
    %710 = vmatprep.subr.mxu0 0.0
    %711 = vmatpush1.msra.mxu0 0.0
    %712 = vmatprep.subr.mxu0 0.0
    %713 = vmatpush1.msra.mxu0 0.0
    %714 = vmatprep.subr.mxu0 0.0
    %715 = vmatpush1.msra.mxu0 0.0
    %716 = vmatprep.subr.mxu0 0.0
    %717 = vmatpush1.msra.mxu0 0.0
    %718 = vmatprep.subr.mxu0 0.0
    %719 = vmatpush1.msra.mxu0 0.0
    %720 = vmatprep.subr.mxu0 0.0
    %721 = vmatpush1.msra.mxu0 0.0
    %722 = vmatprep.subr.mxu0 0.0
    %723 = vmatpush1.msra.mxu0 0.0
    %724 = vmatprep.subr.mxu0 0.0
    %725 = vmatpush1.msra.mxu0 0.0
    %726 = vmatprep.subr.mxu0 0.0
    %727 = vmatpush1.msra.mxu0 0.0
    %728 = vmatprep.subr.mxu0 0.0
    %729 = vmatpush1.msra.mxu0 0.0
    %730 = vmatprep.subr.mxu0 0.0
    %731 = vmatpush1.msra.mxu0 0.0
    %732 = vmatprep.subr.mxu0 0.0
    %733 = vmatpush1.msra.mxu0 0.0
    %734 = vmatprep.subr.mxu0 0.0
    %735 = vmatpush1.msra.mxu0 0.0
    %736 = vmatprep.subr.mxu0 0.0
    %737 = vmatpush1.msra.mxu0 0.0
    %738 = vmatprep.subr.mxu0 0.0
    %739 = vmatpush1.msra.mxu0 0.0
    %740 = vmatprep.subr.mxu0 0.0
    %741 = vmatpush1.msra.mxu0 0.0
    %742 = vmatprep.mubr.f32.mxu0 0.0
    %743 = vmatmul.mubr.f32.gmra.mrb[0].mxu0 %v667
    %v744 = vpop.f32.mrb[0].mxu0
    %v745 = vadd.f32 0.0, %v744
    %v746 = vpop.f32.mrb[0].mxu0
    %747 = vmatprep.mubr.f32.mxu0 0.0
    %748 = vmatmul.mubr.f32.gmra.mrb[0].mxu0 %v670
    %v749 = vpop.f32.mrb[0].mxu0
    %v750 = vadd.f32 0.0, %v749
    %v751 = vpop.f32.mrb[0].mxu0
    %752 = vmatprep.mubr.f32.mxu0 0.0
    %753 = vmatmul.mubr.f32.gmra.mrb[0].mxu0 %v673
    %v754 = vpop.f32.mrb[0].mxu0
    %v755 = vadd.f32 0.0, %v754
    %v756 = vpop.f32.mrb[0].mxu0
    %757 = vmatprep.mubr.f32.mxu0 0.0
    %758 = vmatmul.mubr.f32.gmra.mrb[0].mxu0 %v676
    %v759 = vpop.f32.mrb[0].mxu0
    %v760 = vadd.f32 0.0, %v759
    %v761 = vpop.f32.mrb[0].mxu0
    %762 = vdwg.mxu0
    %v763 = vmul.f32 %v745, %v658
    %v764 = vmul.f32 %v750, %v659
    %v765 = vmul.f32 %v755, %v660
    %v766 = vmul.f32 %v760, %v661
    %v767 = vadd.f32 %v613, %v763
    %v768 = vadd.f32 %v614, %v764
    %v769 = vadd.f32 %v615, %v765
    %v770 = vadd.f32 %v616, %v766
    %771 = vst.msk [vmem:[#allocation8] sm:$0xff] %vm74, %v767
    %772 = vst.msk [vmem:[#allocation8 + $0x8] sm:$0xff] %vm74, %v768
    %773 = vst.msk [vmem:[#allocation8 + $0x10] sm:$0xff] %vm74, %v769
    %774 = vst.msk [vmem:[#allocation8 + $0x18] sm:$0xff] %vm74, %v770
    // Predicated region
    $region30: #{tpu_custom_call.1} parent=1 // pred_check
      _
    $region31: #{tpu_custom_call.1} parent=1 // pred_check_branch
      %776 = sbr.rel (0) target = $region33
    $region32: #{tpu_custom_call.1} parent=1 // pred_region
      %s778 = ssub.s32 512, 512
      %779 = vsyncadd [#allocation4], %s778
      %s780 = sshll.u32 [#allocation8], 4
      %s781 = int_to_ptr.vmem [resolvable:$true] %s780
      %786 = dma.vmem_to_hbm [thread:$0]  %s781, 512, %s4, [#allocation4], 128, 128, 8
    $region33: #{tpu_custom_call.1} parent=1 // pred_fallthru
      _
    // Predicated region
    $region34: #{tpu_custom_call.1} parent=1 // pred_check
      _
    $region35: #{tpu_custom_call.1} parent=1 // pred_check_branch
      %788 = sbr.rel (0) target = $region37
    $region36: #{tpu_custom_call.1} parent=1 // pred_region
      %789 = dma.done [#allocation4], 512
    $region37: #{tpu_custom_call.1} parent=1 // pred_fallthru
      _
    %790 = vsyncpa [#allocation3], 1
    %791 = vsyncpa [#allocation6], 1
    %792 = vsyncpa [#allocation4], 1

</llo_original>
